<compile_context>
chip_gen: v5e
topology: v5e:2x2
jax: 0.10.0
libtpu: 0.0.40
codegen_flags: <defaults>
</compile_context>

<pallas_src>
import jax
import jax.numpy as jnp
from jax.experimental import pallas as pl
from jax.experimental.pallas import tpu as pltpu


def _patch_embed_kernel(p_ref, w_ref, b_ref, o_ref):
    """o_tile = patches_tile @ W + b   (f32 accumulation on the MXU)."""
    acc = jnp.dot(p_ref[...], w_ref[...], preferred_element_type=jnp.float32)
    o_ref[...] = (acc + b_ref[...].astype(jnp.float32)).astype(o_ref.dtype)


def _round_up(v, m):
    return ((v + m - 1) // m) * m


def _vmem_footprint(tm, K, E, in_itemsize, out_itemsize):
    # double-buffered patch tile + resident weight + resident bias
    # + double-buffered output tile
    return (2 * tm * K * in_itemsize
            + K * E * in_itemsize
            + 8 * E * 4
            + 2 * tm * E * out_itemsize)


def linear_patch_embed(x, weight, bias, *, patch_size,
                       matmul_dtype=None, out_dtype=None,
                       block_m=512, vmem_budget_bytes=40 * 1024 * 1024,
                       allow_input_fusion=True):
    """LinearPatchEmbed.forward as a Pallas TPU kernel.

    x:      (B, C, H, W)        image batch (C == 3 in the PyTorch module)
    weight: (C*p*p, emb_dim)    == torch nn.Linear.weight.T  (in, out) layout
    bias:   (emb_dim,)          == torch nn.Linear.bias
    Returns (B, num_patches, emb_dim).
    """
    B, C, H, W = x.shape
    p = patch_size
    assert H % p == 0 and W % p == 0, "spatial dims must be divisible by patch_size"
    h, w = H // p, W // p
    N = h * w
    K = C * p * p
    assert weight.shape[0] == K, (weight.shape, K)
    E = weight.shape[1]

    # Cast BEFORE the rearrange so the (M, K) slab round-trips HBM at half
    # width when a bf16 matmul path is requested (recommended on v5e/v6e).
    if matmul_dtype is not None:
        x = x.astype(matmul_dtype)
        weight = weight.astype(matmul_dtype)
    if out_dtype is None:
        out_dtype = x.dtype

    # einops Rearrange 'b c (h p1) (w p2) -> b (h w) (p1 p2 c)': pure layout,
    # done once in the wrapper (optionally fused into the input DMA below).
    patches = x.reshape(B, C, h, p, w, p).transpose(0, 2, 4, 3, 5, 1)
    patches = patches.reshape(B * N, K)
    bias2d = bias.reshape(1, E)

    M = B * N
    in_sz = jnp.dtype(patches.dtype).itemsize
    out_sz = jnp.dtype(out_dtype).itemsize

    # Row-tile selection: as large as block_m / the VMEM budget allow
    # (multiple of 8), and >= 2 tiles when there is enough work so both
    # v7x TensorCores are fed.
    tm = max(8, min(_round_up(block_m, 8), _round_up(M, 8)))
    while _vmem_footprint(tm, K, E, in_sz, out_sz) > vmem_budget_bytes and tm > 8:
        tm = max(8, _round_up(tm // 2, 8))
    if M > 8 and pl.cdiv(M, tm) < 2:
        tm = max(8, _round_up(pl.cdiv(M, 2), 8))

    # Pad M to a whole number of row tiles (zero rows, sliced off afterwards)
    # so the tile size never silently collapses for awkward M.
    m_pad = pl.cdiv(M, tm) * tm
    if m_pad != M:
        patches = jnp.pad(patches, ((0, m_pad - M), (0, 0)))
    grid = (m_pad // tm,)

    footprint = _vmem_footprint(tm, K, E, in_sz, out_sz)
    vmem_limit = int(min(max(footprint + (4 << 20), 16 << 20), 64 << 20))

    cost = pl.CostEstimate(
        flops=2 * m_pad * K * E,
        transcendentals=0,
        bytes_accessed=(m_pad * K * in_sz      # patch slab read once
                        + K * E * in_sz        # weight read once (resident)
                        + E * 4                # bias
                        + m_pad * E * out_sz), # output writeback
    )

    def _call(compiler_params):
        fn = pl.pallas_call(
            _patch_embed_kernel,
            out_shape=jax.ShapeDtypeStruct((m_pad, E), out_dtype),
            grid_spec=pltpu.PrefetchScalarGridSpec(
                num_scalar_prefetch=0,
                grid=grid,
                in_specs=[
                    pl.BlockSpec((tm, K), lambda i: (i, 0)),   # streamed patch tile (full K)
                    pl.BlockSpec((K, E), lambda i: (0, 0)),    # VMEM-resident weight
                    pl.BlockSpec((1, E), lambda i: (0, 0)),    # VMEM-resident bias
                ],
                out_specs=pl.BlockSpec((tm, E), lambda i: (i, 0)),
            ),
            compiler_params=compiler_params,
            cost_estimate=cost,
        )
        return fn(patches, weight, bias2d)

    base = dict(dimension_semantics=("parallel",), vmem_limit_bytes=vmem_limit)
    out = None
    if allow_input_fusion:
        try:
            # Best effort: let XLA fuse the rearrange/pad producer of operand 0
            # into the kernel's input DMA instead of materializing it in HBM.
            out = jax.block_until_ready(
                _call(pltpu.CompilerParams(
                    allow_input_fusion=[True, False, False], **base)))
        except Exception:
            out = None   # fall back to the plain (still-correct) path
    if out is None:
        out = _call(pltpu.CompilerParams(**base))

    return out[:M].reshape(B, N, E)


def linear_patch_embed_ref(x, weight, bias, *, patch_size):
    """Pure-JAX reference mirroring the PyTorch forward exactly."""
    B, C, H, W = x.shape
    p = patch_size
    h, w = H // p, W // p
    patches = x.reshape(B, C, h, p, w, p).transpose(0, 2, 4, 3, 5, 1)
    patches = patches.reshape(B, h * w, C * p * p)
    proj = jnp.matmul(patches, weight, precision=jax.lax.Precision.HIGHEST)
    return proj + bias


if __name__ == "__main__":
    # 3-channel 16x16 images, patch 4, emb_dim = 512 (module default).
    B, C, HW, P, E = 2, 3, 16, 4, 512
    K = C * P * P                      # 48

    key = jax.random.PRNGKey(0)
    kx, kw, kb = jax.random.split(key, 3)
    x = jax.random.normal(kx, (B, C, HW, HW), jnp.float32)
    weight = 0.05 * jax.random.normal(kw, (K, E), jnp.float32)   # == torch Linear.weight.T
    bias = 0.05 * jax.random.normal(kb, (E,), jnp.float32)

    out = linear_patch_embed(x, weight, bias, patch_size=P)
    out = jax.block_until_ready(out)

    ref = linear_patch_embed_ref(x, weight, bias, patch_size=P)
    n_patches = (HW // P) * (HW // P)
    assert out.shape == (B, n_patches, E), out.shape
    assert jnp.allclose(out, ref, rtol=1e-4, atol=1e-4), (
        float(jnp.max(jnp.abs(out - ref))))

    print("KERNEL_OK")
</pallas_src>

<mosaic_0001>
module attributes {stable_mosaic.version = 11 : i64} {
  func.func @_patch_embed_kernel(%arg0: i32, %arg1: memref<16x48xf32, #tpu.memory_space<vmem>>, %arg2: memref<48x512xf32, #tpu.memory_space<vmem>>, %arg3: memref<1x512xf32, #tpu.memory_space<vmem>>, %arg4: memref<16x512xf32, #tpu.memory_space<vmem>>) attributes {dimension_semantics = [#tpu.dimension_semantics<parallel>], iteration_bounds = array<i64: 2>, scalar_prefetch = 0 : i64, scratch_operands = 0 : i64, tpu.core_type = #tpu.core_type<tc>, window_params = [{transform_indices = @transform_0, window_bounds = array<i64: 16, 48>}, {pipeline_mode = #tpu.pipeline_mode<synchronous>, transform_indices = @transform_1, window_bounds = array<i64: 48, 512>}, {pipeline_mode = #tpu.pipeline_mode<synchronous>, transform_indices = @transform_2, window_bounds = array<i64: 1, 512>}, {transform_indices = @transform_3, window_bounds = array<i64: 16, 512>}]} {
    %c0 = arith.constant 0 : index
    %c0_0 = arith.constant 0 : index
    %0 = vector.load %arg1[%c0, %c0_0] : memref<16x48xf32, #tpu.memory_space<vmem>>, vector<16x48xf32>
    %c0_1 = arith.constant 0 : index
    %c0_2 = arith.constant 0 : index
    %1 = vector.load %arg2[%c0_1, %c0_2] : memref<48x512xf32, #tpu.memory_space<vmem>>, vector<48x512xf32>
    %cst = arith.constant dense<0.000000e+00> : vector<16x512xf32>
    %2 = tpu.matmul %0, %1, %cst {dimension_numbers = #tpu.dot_dimension_numbers<[1], [0], [0], [1], [0, 0, 1, 1], [], []>} : vector<16x48xf32>, vector<48x512xf32>, vector<16x512xf32> -> vector<16x512xf32>
    %c0_3 = arith.constant 0 : index
    %c0_4 = arith.constant 0 : index
    %3 = vector.load %arg3[%c0_3, %c0_4] : memref<1x512xf32, #tpu.memory_space<vmem>>, vector<1x512xf32>
    %4 = vector.broadcast %3 : vector<1x512xf32> to vector<16x512xf32>
    %5 = arith.addf %2, %4 : vector<16x512xf32>
    %c0_5 = arith.constant 0 : index
    %c0_6 = arith.constant 0 : index
    %6 = vector.load %arg4[%c0_5, %c0_6] : memref<16x512xf32, #tpu.memory_space<vmem>>, vector<16x512xf32>
    tpu.vector_store %arg4[%c0_5, %c0_6], %5 {strides = array<i32>} : memref<16x512xf32, #tpu.memory_space<vmem>>, vector<16x512xf32>,
    return
  }
  func.func @transform_0(%arg0: i32) -> (i32, i32) {
    %c0_i32 = arith.constant 0 : i32
    %c0_i32_0 = arith.constant 0 : i32
    return %arg0, %c0_i32 : i32, i32
  }
  func.func @transform_1(%arg0: i32) -> (i32, i32) {
    %c0_i32 = arith.constant 0 : i32
    %c0_i32_0 = arith.constant 0 : i32
    %c0_i32_1 = arith.constant 0 : i32
    return %c0_i32, %c0_i32_0 : i32, i32
  }
  func.func @transform_2(%arg0: i32) -> (i32, i32) {
    %c0_i32 = arith.constant 0 : i32
    %c0_i32_0 = arith.constant 0 : i32
    %c0_i32_1 = arith.constant 0 : i32
    return %c0_i32, %c0_i32_0 : i32, i32
  }
  func.func @transform_3(%arg0: i32) -> (i32, i32) {
    %c0_i32 = arith.constant 0 : i32
    %c0_i32_0 = arith.constant 0 : i32
    return %arg0, %c0_i32 : i32, i32
  }
}

module attributes {stable_mosaic.version = 11 : i64} {
  func.func @_patch_embed_kernel(%arg0: i32, %arg1: memref<16x48xf32, #tpu.memory_space<vmem>>, %arg2: memref<48x512xf32, #tpu.memory_space<vmem>>, %arg3: memref<1x512xf32, #tpu.memory_space<vmem>>, %arg4: memref<16x512xf32, #tpu.memory_space<vmem>>) attributes {dimension_semantics = [#tpu.dimension_semantics<parallel>], iteration_bounds = array<i64: 2>, scalar_prefetch = 0 : i64, scratch_operands = 0 : i64, tpu.core_type = #tpu.core_type<tc>, window_params = [{transform_indices = @transform_0, window_bounds = array<i64: 16, 48>}, {pipeline_mode = #tpu.pipeline_mode<synchronous>, transform_indices = @transform_1, window_bounds = array<i64: 48, 512>}, {pipeline_mode = #tpu.pipeline_mode<synchronous>, transform_indices = @transform_2, window_bounds = array<i64: 1, 512>}, {transform_indices = @transform_3, window_bounds = array<i64: 16, 512>}]} {
    %c0 = arith.constant 0 : index
    %c0_0 = arith.constant 0 : index
    %0 = vector.load %arg1[%c0, %c0_0] : memref<16x48xf32, #tpu.memory_space<vmem>>, vector<16x48xf32>
    %c0_1 = arith.constant 0 : index
    %c0_2 = arith.constant 0 : index
    %1 = vector.load %arg2[%c0_1, %c0_2] : memref<48x512xf32, #tpu.memory_space<vmem>>, vector<48x512xf32>
    %cst = arith.constant dense<0.000000e+00> : vector<16x512xf32>
    %2 = tpu.matmul %0, %1, %cst {dimension_numbers = #tpu.dot_dimension_numbers<[1], [0], [0], [1], [0, 0, 1, 1], [], []>} : vector<16x48xf32>, vector<48x512xf32>, vector<16x512xf32> -> vector<16x512xf32>
    %c0_3 = arith.constant 0 : index
    %c0_4 = arith.constant 0 : index
    %3 = vector.load %arg3[%c0_3, %c0_4] : memref<1x512xf32, #tpu.memory_space<vmem>>, vector<1x512xf32>
    %4 = vector.broadcast %3 : vector<1x512xf32> to vector<16x512xf32>
    %5 = arith.addf %2, %4 : vector<16x512xf32>
    %c0_5 = arith.constant 0 : index
    %c0_6 = arith.constant 0 : index
    %6 = vector.load %arg4[%c0_5, %c0_6] : memref<16x512xf32, #tpu.memory_space<vmem>>, vector<16x512xf32>
    tpu.vector_store %arg4[%c0_5, %c0_6], %5 {strides = array<i32>} : memref<16x512xf32, #tpu.memory_space<vmem>>, vector<16x512xf32>,
    return
  }
  func.func @transform_0(%arg0: i32) -> (i32, i32) {
    %c0_i32 = arith.constant 0 : i32
    %c0_i32_0 = arith.constant 0 : i32
    return %arg0, %c0_i32 : i32, i32
  }
  func.func @transform_1(%arg0: i32) -> (i32, i32) {
    %c0_i32 = arith.constant 0 : i32
    %c0_i32_0 = arith.constant 0 : i32
    %c0_i32_1 = arith.constant 0 : i32
    return %c0_i32, %c0_i32_0 : i32, i32
  }
  func.func @transform_2(%arg0: i32) -> (i32, i32) {
    %c0_i32 = arith.constant 0 : i32
    %c0_i32_0 = arith.constant 0 : i32
    %c0_i32_1 = arith.constant 0 : i32
    return %c0_i32, %c0_i32_0 : i32, i32
  }
  func.func @transform_3(%arg0: i32) -> (i32, i32) {
    %c0_i32 = arith.constant 0 : i32
    %c0_i32_0 = arith.constant 0 : i32
    return %arg0, %c0_i32 : i32, i32
  }
}

</mosaic_0001>

<llo_original>
// kernel: tpu_custom_call.1
$region0: #{tpu_custom_call.1}
  #allocation0 [shape = 'u32[]', space=smem, size = 0x4, offset = 0x4, fixed_abs, tag = 'smem constant byte address 0x4 - core index']
  #allocation1 [shape = 'u32[72,128]{1,0:T(1,128)}', space=vmem, size = 0x9000, scoped, tag = 'internal scratch']
  %s0 = inlined_call_operand.hbm [shape: f32[32,48], index: 0, kind: input, shape index: {}]
  %s1 = inlined_call_operand.hbm [shape: f32[48,512], index: 1, kind: input, shape index: {}]
  %s2 = inlined_call_operand.hbm [shape: f32[1,512], index: 2, kind: input, shape index: {}]
  %s3 = inlined_call_operand.hbm [shape: f32[32,512], index: 3, kind: output, shape index: {}]
  %s4 = sld [smem:[#allocation0]]
  $region57: #{tpu_custom_call.1} parent=0
    _
  %s6 = ssub.s32 1, %s4
  %s7 = scalar_select 0, %s6, %s4
  $region1: #{tpu_custom_call.1} parent=0
    #allocation2 [shape = 'u8[16384]{0}', space=vmem, size = 0x4000, scoped, tag = 'input window, operand 0']
    #allocation3 [shape = 's32[2]{0}', space=sflag, size = 0x8, scoped, tag = 'scoped memory for tpu_custom_call.1']
    #allocation4 [shape = 's32[2]{0}', space=sflag, size = 0x8, scoped, tag = 'scoped memory for tpu_custom_call.1']
    #allocation5 [shape = 'u8[98304]{0}', space=vmem, size = 0x18000, scoped, tag = 'input window, operand 1, single buffered']
    #allocation6 [shape = 's32[1]{0}', space=sflag, size = 0x4, scoped, tag = 'scoped memory for tpu_custom_call.1']
    #allocation7 [shape = 'u8[2048]{0}', space=vmem, size = 0x800, scoped, tag = 'input window, operand 2, single buffered']
    #allocation8 [shape = 'u8[65536]{0}', space=vmem, size = 0x10000, scoped, tag = 'output window, operand 0']
    %8 = vsyncpa [#allocation3], 0
    %s9 = scalar_lea.sflag [#allocation3], 1
    %10 = vsyncpa %s9, 0
    %11 = vsyncpa [#allocation6], 0
    %12 = vsyncpa [#allocation4], 0
    %s13 = scalar_lea.sflag [#allocation4], 1
    %14 = vsyncpa %s13, 0
    loop: start=0, step=1, limit=4
    $region2: #{tpu_custom_call.1} parent=1 // loop_pre_header
      _
    $region3: #{tpu_custom_call.1} parent=1 // loop_header
      %s16 = sphi 0, %s20
      %p17 = scmp.ge.s32.totalorder %s16, 4
      %s26 = sphi 0, %s28
      %s29 = sphi 0, %s26
      %s30 = sphi 0, %s29
      %s46 = sphi 0, %s30
      %s50 = sphi 0, %s50
      %s52 = sphi 0, %s50
      %s53 = sphi 0, %s52
      %s67 = sphi 0, %s53
      %s71 = sphi 0, %s71
      %s73 = sphi 0, %s71
      %s74 = sphi 0, %s73
      %s88 = sphi 0, %s74
      %s94 = sphi 0, %s96
      %s97 = sphi 0, %s94
      %s98 = sphi 0, %s97
      %s114 = sphi 0, %s98
    $region4: #{tpu_custom_call.1} parent=1 // loop_header_branch
      %19 = sbr.rel (%p17) target = $region8
    $region5: #{tpu_custom_call.1} parent=1 // loop_body
      %s21 = ssub.s32 %s16, 1
      %s22 = ssub.s32 %s16, 2
      %s23 = sadd.s32 %s16, 1
      %s24 = ssub.s32 %s16, %s23
      %p25 = scmp.eq.s32.totalorder %s24, 0
      %s27 = sadd.s32 %s26, 1
      %s28 = scalar_select %p25, %s26, %s27
      %p31 = pneg %p25
      %p32 = scmp.eq.s32.totalorder %s16, 1
      %p33 = por %p31, %p32
      %p34 = scmp.ne.s32.totalorder %s26, %s29
      %p35 = scmp.eq.s32.totalorder %s16, 0
      %p36 = por %p34, %p35
      %p37 = scmp.ne.s32.totalorder %s26, %s29
      %p38 = scmp.eq.s32.totalorder %s21, 1
      %p39 = por %p37, %p38
      %p40 = scmp.ne.s32.totalorder %s29, %s30
      %p41 = scmp.eq.s32.totalorder %s21, 0
      %p42 = por %p40, %p41
      %p43 = scmp.ne.s32.totalorder %s29, %s30
      %p44 = scmp.eq.s32.totalorder %s22, 1
      %p45 = por %p43, %p44
      %p47 = scmp.ne.s32.totalorder %s30, %s46
      %p48 = scmp.eq.s32.totalorder %s22, 0
      %p49 = por %p47, %p48
      %s51 = sadd.s32 %s50, 1
      %p54 = scmp.eq.s32.totalorder %s16, 1
      %p55 = scmp.ne.s32.totalorder %s50, %s52
      %p56 = scmp.eq.s32.totalorder %s16, 0
      %p57 = por %p55, %p56
      %p58 = scmp.ne.s32.totalorder %s50, %s52
      %p59 = scmp.eq.s32.totalorder %s21, 1
      %p60 = por %p58, %p59
      %p61 = scmp.ne.s32.totalorder %s52, %s53
      %p62 = scmp.eq.s32.totalorder %s21, 0
      %p63 = por %p61, %p62
      %p64 = scmp.ne.s32.totalorder %s52, %s53
      %p65 = scmp.eq.s32.totalorder %s22, 1
      %p66 = por %p64, %p65
      %p68 = scmp.ne.s32.totalorder %s53, %s67
      %p69 = scmp.eq.s32.totalorder %s22, 0
      %p70 = por %p68, %p69
      %s72 = sadd.s32 %s71, 1
      %p75 = scmp.eq.s32.totalorder %s16, 1
      %p76 = scmp.ne.s32.totalorder %s71, %s73
      %p77 = scmp.eq.s32.totalorder %s16, 0
      %p78 = por %p76, %p77
      %p79 = scmp.ne.s32.totalorder %s71, %s73
      %p80 = scmp.eq.s32.totalorder %s21, 1
      %p81 = por %p79, %p80
      %p82 = scmp.ne.s32.totalorder %s73, %s74
      %p83 = scmp.eq.s32.totalorder %s21, 0
      %p84 = por %p82, %p83
      %p85 = scmp.ne.s32.totalorder %s73, %s74
      %p86 = scmp.eq.s32.totalorder %s22, 1
      %p87 = por %p85, %p86
      %p89 = scmp.ne.s32.totalorder %s74, %s88
      %p90 = scmp.eq.s32.totalorder %s22, 0
      %p91 = por %p89, %p90
      %s92 = ssub.s32 %s16, %s23
      %p93 = scmp.eq.s32.totalorder %s92, 0
      %s95 = sadd.s32 %s94, 1
      %s96 = scalar_select %p93, %s94, %s95
      %p99 = pneg %p93
      %p100 = scmp.eq.s32.totalorder %s16, 1
      %p101 = por %p99, %p100
      %p102 = scmp.ne.s32.totalorder %s94, %s97
      %p103 = scmp.eq.s32.totalorder %s16, 0
      %p104 = por %p102, %p103
      %p105 = scmp.ne.s32.totalorder %s94, %s97
      %p106 = scmp.eq.s32.totalorder %s21, 1
      %p107 = por %p105, %p106
      %p108 = scmp.ne.s32.totalorder %s97, %s98
      %p109 = scmp.eq.s32.totalorder %s21, 0
      %p110 = por %p108, %p109
      %p111 = scmp.ne.s32.totalorder %s97, %s98
      %p112 = scmp.eq.s32.totalorder %s22, 1
      %p113 = por %p111, %p112
      %p115 = scmp.ne.s32.totalorder %s98, %s114
      %p116 = scmp.eq.s32.totalorder %s22, 0
      %p117 = por %p115, %p116
      %p118 = scmp.le.s32.totalorder 1, %s16
      %p119 = scmp.lt.s32.totalorder %s16, 3
      %p120 = pnand %p118, %p119
      %p121 = pneg %p120
      // Predicated region
      $region9: #{tpu_custom_call.1} parent=5 // pred_check
        _
      $region10: #{tpu_custom_call.1} parent=5 // pred_check_branch
        %123 = sbr.rel (%p120) target = $region12
      $region11: #{tpu_custom_call.1} parent=5 // pred_region
        %s124 = ssub.s32 %s16, 1
        // Predicated region
        $region13: #{tpu_custom_call.1} parent=11 // pred_check
          %p125 = pneg %p63
        $region14: #{tpu_custom_call.1} parent=11 // pred_check_branch
          %127 = sbr.rel (%p125) target = $region16
        $region15: #{tpu_custom_call.1} parent=11 // pred_region
          %129 = vsyncadd [#allocation6], 0
          %s130 = sshll.u32 %s1, 4
          %s131 = int_to_ptr.hbm [resolvable:$true] %s130
          %s132 = sshll.u32 [#allocation5], 4
          %s133 = int_to_ptr.vmem [resolvable:$true] %s132
          %138 = dma.hbm_to_vmem [thread:$0]  %s131, 3072, %s133, [#allocation6], 512, 512, 32
        $region16: #{tpu_custom_call.1} parent=11 // pred_fallthru
          _
        // Predicated region
        $region17: #{tpu_custom_call.1} parent=11 // pred_check
          %p139 = pneg %p84
        $region18: #{tpu_custom_call.1} parent=11 // pred_check_branch
          %141 = sbr.rel (%p139) target = $region20
        $region19: #{tpu_custom_call.1} parent=11 // pred_region
          %143 = vsyncadd [#allocation6], 0
          %s145 = sshll.u32 %s2, 4
          %s146 = int_to_ptr.hbm [resolvable:$true] %s145
          %s147 = sshll.u32 [#allocation7], 4
          %s148 = int_to_ptr.vmem [resolvable:$true] %s147
          %150 = dma.hbm_to_vmem [thread:$0]  %s146, 64, %s148, [#allocation6]
        $region20: #{tpu_custom_call.1} parent=11 // pred_fallthru
          _
      $region12: #{tpu_custom_call.1} parent=5 // pred_fallthru
        _
      %p151 = scmp.lt.s32.totalorder %s16, 2
      // Predicated region
      $region21: #{tpu_custom_call.1} parent=5 // pred_check
        %p152 = pneg %p151
      $region22: #{tpu_custom_call.1} parent=5 // pred_check_branch
        %154 = sbr.rel (%p152) target = $region24
      $region23: #{tpu_custom_call.1} parent=5 // pred_region
        // Predicated region
        $region25: #{tpu_custom_call.1} parent=23 // pred_check
          %p155 = pneg %p36
        $region26: #{tpu_custom_call.1} parent=23 // pred_check_branch
          %157 = sbr.rel (%p155) target = $region28
        $region27: #{tpu_custom_call.1} parent=23 // pred_region
          %s158 = sand.u32 %s26, 1
          %s159 = scalar_lea.sflag [#allocation3], %s158
          %s160 = sand.u32 %s26, 1
          %s161 = smul.addr %s160, 16
          %s162 = scalar_lea.vmem [#allocation2], %s161
          %s163 = smul.u32 2, %s16
          %165 = vsyncadd %s159, 0
          %s166 = smul.addr %s163, 8
          %s167 = scalar_lea.hbm %s0, %s166
          %s168 = sshll.u32 %s167, 4
          %s169 = int_to_ptr.hbm [resolvable:$true] %s168
          %s170 = sshll.u32 %s162, 4
          %s171 = int_to_ptr.vmem [resolvable:$true] %s170
          %176 = dma.hbm_to_vmem [thread:$0]  %s169, 256, %s171, %s159, 128, 128, 8
        $region28: #{tpu_custom_call.1} parent=23 // pred_fallthru
          _
      $region24: #{tpu_custom_call.1} parent=5 // pred_fallthru
        _
      %p177 = scmp.le.s32.totalorder 1, %s16
      %p178 = scmp.lt.s32.totalorder %s16, 3
      %p179 = pnand %p177, %p178
      %p180 = pneg %p179
      // Predicated region
      $region29: #{tpu_custom_call.1} parent=5 // pred_check
        _
      $region30: #{tpu_custom_call.1} parent=5 // pred_check_branch
        %182 = sbr.rel (%p179) target = $region32
      $region31: #{tpu_custom_call.1} parent=5 // pred_region
        %s183 = ssub.s32 %s16, 1
        %s184 = sand.u32 %s29, 1
        %s185 = scalar_lea.sflag [#allocation3], %s184
        %s186 = sand.u32 %s29, 1
        %s187 = smul.addr %s186, 16
        %s188 = scalar_lea.vmem [#allocation2], %s187
        // Predicated region
        $region33: #{tpu_custom_call.1} parent=31 // pred_check
          %p189 = pneg %p42
        $region34: #{tpu_custom_call.1} parent=31 // pred_check_branch
          %191 = sbr.rel (%p189) target = $region36
        $region35: #{tpu_custom_call.1} parent=31 // pred_region
          %193 = dma.done %s185, 256
        $region36: #{tpu_custom_call.1} parent=31 // pred_fallthru
          _
        // Predicated region
        $region37: #{tpu_custom_call.1} parent=31 // pred_check
          %p194 = pneg %p63
        $region38: #{tpu_custom_call.1} parent=31 // pred_check_branch
          %196 = sbr.rel (%p194) target = $region40
        $region39: #{tpu_custom_call.1} parent=31 // pred_region
          %198 = dma.done [#allocation6], 3072
        $region40: #{tpu_custom_call.1} parent=31 // pred_fallthru
          _
        // Predicated region
        $region41: #{tpu_custom_call.1} parent=31 // pred_check
          %p199 = pneg %p84
        $region42: #{tpu_custom_call.1} parent=31 // pred_check_branch
          %201 = sbr.rel (%p199) target = $region44
        $region43: #{tpu_custom_call.1} parent=31 // pred_region
          %203 = dma.done [#allocation6], 64
        $region44: #{tpu_custom_call.1} parent=31 // pred_fallthru
          _
        %s204 = sand.u32 %s29, 1
        %s205 = scalar_lea.sflag [#allocation3], %s204
        %s206 = sand.u32 %s29, 1
        %s207 = smul.addr %s206, 16
        %s208 = scalar_lea.vmem [#allocation2], %s207
        %p209 = pneg %p42
        %p210 = pneg %p39
        %p211 = pneg %p63
        %p212 = pneg %p60
        %p213 = pneg %p84
        %p214 = pneg %p81
        %p215 = pneg %p110
        %p216 = pneg %p107
        %s217 = sand.u32 %s97, 1
        %s218 = scalar_lea.sflag [#allocation4], %s217
        %s219 = sand.u32 %s97, 1
        %s220 = smul.addr %s219, 64
        %s221 = scalar_lea.vmem [#allocation8], %s220
        %s222 = smul.u32 2, %s21
        %s223 = smul.u32 2, %s21
        %v224 = vld [vmem:[%s188] sm:$0xff]
        %v225 = vld [vmem:[%s188 + $0x8] sm:$0xff]
        %v226 = vld [vmem:[#allocation5] sm:$0xff]
        %v227 = vld [vmem:[#allocation5 + $0x8] sm:$0xff]
        %v228 = vld [vmem:[#allocation5 + $0x10] sm:$0xff]
        %v229 = vld [vmem:[#allocation5 + $0x18] sm:$0xff]
        %v230 = vld [vmem:[#allocation5 + $0x20] sm:$0xff]
        %v231 = vld [vmem:[#allocation5 + $0x28] sm:$0xff]
        %v232 = vld [vmem:[#allocation5 + $0x30] sm:$0xff]
        %v233 = vld [vmem:[#allocation5 + $0x38] sm:$0xff]
        %v234 = vld [vmem:[#allocation5 + $0x40] sm:$0xff]
        %v235 = vld [vmem:[#allocation5 + $0x48] sm:$0xff]
        %v236 = vld [vmem:[#allocation5 + $0x50] sm:$0xff]
        %v237 = vld [vmem:[#allocation5 + $0x58] sm:$0xff]
        %v238 = vld [vmem:[#allocation5 + $0x60] sm:$0xff]
        %v239 = vld [vmem:[#allocation5 + $0x68] sm:$0xff]
        %v240 = vld [vmem:[#allocation5 + $0x70] sm:$0xff]
        %v241 = vld [vmem:[#allocation5 + $0x78] sm:$0xff]
        %v242 = vld [vmem:[#allocation5 + $0x80] sm:$0xff]
        %v243 = vld [vmem:[#allocation5 + $0x88] sm:$0xff]
        %v244 = vld [vmem:[#allocation5 + $0x90] sm:$0xff]
        %v245 = vld [vmem:[#allocation5 + $0x98] sm:$0xff]
        %v246 = vld [vmem:[#allocation5 + $0xa0] sm:$0xff]
        %v247 = vld [vmem:[#allocation5 + $0xa8] sm:$0xff]
        %v248 = vld [vmem:[#allocation5 + $0xb0] sm:$0xff]
        %v249 = vld [vmem:[#allocation5 + $0xb8] sm:$0xff]
        %v250 = vld [vmem:[#allocation7] sm:$0xf]
        %v252 = vperm.slane %v250, 0
        %v253 = vperm.slane %v250, 1
        %v254 = vperm.slane %v250, 2
        %v255 = vperm.slane %v250, 3
        %vm260 = vcmask 392192
        %v262 = vsel %vm260, %v224, 0
        %v265 = vsel %vm260, %v225, 0
        %267 = vmatpush.msra.mxu0 0.0
        %268 = vmatpush.msra.mxu0 0.0
        %269 = vmatpush.msra.mxu0 0.0
        %270 = vmatpush.msra.mxu0 0.0
        %271 = vmatpush.msra.mxu0 0.0
        %272 = vmatpush.msra.mxu0 0.0
        %273 = vmatpush.msra.mxu0 0.0
        %274 = vmatpush.msra.mxu0 0.0
        %275 = vmatpush.msra.mxu0 0.0
        %276 = vmatpush.msra.mxu0 0.0
        %277 = vmatpush.msra.mxu0 %v246
        %278 = vmatpush.msra.mxu0 %v242
        %279 = vmatpush.msra.mxu0 %v238
        %280 = vmatpush.msra.mxu0 %v234
        %281 = vmatpush.msra.mxu0 %v230
        %282 = vmatpush.msra.mxu0 %v226
        %283 = vmatmul.f32.gmra.mxu0 %v262
        %v284 = vpop.f32.mrf.mxu0
        %v285 = vadd.f32 %v252, %v284
        %286 = vmatmul.f32.gmra.mxu0 %v265
        %v287 = vpop.f32.mrf.mxu0
        %v288 = vadd.f32 %v252, %v287
        %289 = vdwg.mxu0
        %290 = vmatpush.msra.mxu0 0.0
        %291 = vmatpush.msra.mxu0 0.0
        %292 = vmatpush.msra.mxu0 0.0
        %293 = vmatpush.msra.mxu0 0.0
        %294 = vmatpush.msra.mxu0 0.0
        %295 = vmatpush.msra.mxu0 0.0
        %296 = vmatpush.msra.mxu0 0.0
        %297 = vmatpush.msra.mxu0 0.0
        %298 = vmatpush.msra.mxu0 0.0
        %299 = vmatpush.msra.mxu0 0.0
        %300 = vmatpush.msra.mxu0 %v247
        %301 = vmatpush.msra.mxu0 %v243
        %302 = vmatpush.msra.mxu0 %v239
        %303 = vmatpush.msra.mxu0 %v235
        %304 = vmatpush.msra.mxu0 %v231
        %305 = vmatpush.msra.mxu0 %v227
        %306 = vmatmul.f32.gmra.mxu0 %v262
        %v307 = vpop.f32.mrf.mxu0
        %v308 = vadd.f32 %v253, %v307
        %309 = vmatmul.f32.gmra.mxu0 %v265
        %v310 = vpop.f32.mrf.mxu0
        %v311 = vadd.f32 %v253, %v310
        %312 = vdwg.mxu0
        %313 = vmatpush.msra.mxu0 0.0
        %314 = vmatpush.msra.mxu0 0.0
        %315 = vmatpush.msra.mxu0 0.0
        %316 = vmatpush.msra.mxu0 0.0
        %317 = vmatpush.msra.mxu0 0.0
        %318 = vmatpush.msra.mxu0 0.0
        %319 = vmatpush.msra.mxu0 0.0
        %320 = vmatpush.msra.mxu0 0.0
        %321 = vmatpush.msra.mxu0 0.0
        %322 = vmatpush.msra.mxu0 0.0
        %323 = vmatpush.msra.mxu0 %v248
        %324 = vmatpush.msra.mxu0 %v244
        %325 = vmatpush.msra.mxu0 %v240
        %326 = vmatpush.msra.mxu0 %v236
        %327 = vmatpush.msra.mxu0 %v232
        %328 = vmatpush.msra.mxu0 %v228
        %329 = vmatmul.f32.gmra.mxu0 %v262
        %v330 = vpop.f32.mrf.mxu0
        %v331 = vadd.f32 %v254, %v330
        %332 = vmatmul.f32.gmra.mxu0 %v265
        %v333 = vpop.f32.mrf.mxu0
        %v334 = vadd.f32 %v254, %v333
        %335 = vdwg.mxu0
        %336 = vmatpush.msra.mxu0 0.0
        %337 = vmatpush.msra.mxu0 0.0
        %338 = vmatpush.msra.mxu0 0.0
        %339 = vmatpush.msra.mxu0 0.0
        %340 = vmatpush.msra.mxu0 0.0
        %341 = vmatpush.msra.mxu0 0.0
        %342 = vmatpush.msra.mxu0 0.0
        %343 = vmatpush.msra.mxu0 0.0
        %344 = vmatpush.msra.mxu0 0.0
        %345 = vmatpush.msra.mxu0 0.0
        %346 = vmatpush.msra.mxu0 %v249
        %347 = vmatpush.msra.mxu0 %v245
        %348 = vmatpush.msra.mxu0 %v241
        %349 = vmatpush.msra.mxu0 %v237
        %350 = vmatpush.msra.mxu0 %v233
        %351 = vmatpush.msra.mxu0 %v229
        %352 = vmatmul.f32.gmra.mxu0 %v262
        %v353 = vpop.f32.mrf.mxu0
        %v354 = vadd.f32 %v255, %v353
        %355 = vmatmul.f32.gmra.mxu0 %v265
        %v356 = vpop.f32.mrf.mxu0
        %v357 = vadd.f32 %v255, %v356
        %358 = vdwg.mxu0
        %359 = vst [vmem:[%s221] sm:$0xff] %v285
        %360 = vst [vmem:[%s221 + $0x8] sm:$0xff] %v308
        %361 = vst [vmem:[%s221 + $0x10] sm:$0xff] %v331
        %362 = vst [vmem:[%s221 + $0x18] sm:$0xff] %v354
        %363 = vst [vmem:[%s221 + $0x20] sm:$0xff] %v288
        %364 = vst [vmem:[%s221 + $0x28] sm:$0xff] %v311
        %365 = vst [vmem:[%s221 + $0x30] sm:$0xff] %v334
        %366 = vst [vmem:[%s221 + $0x38] sm:$0xff] %v357
        %s367 = sand.u32 %s97, 1
        %s368 = scalar_lea.sflag [#allocation4], %s367
        %s369 = sand.u32 %s97, 1
        %s370 = smul.addr %s369, 64
        %s371 = scalar_lea.vmem [#allocation8], %s370
        // Predicated region
        $region45: #{tpu_custom_call.1} parent=31 // pred_check
          %p372 = pneg %p107
        $region46: #{tpu_custom_call.1} parent=31 // pred_check_branch
          %374 = sbr.rel (%p372) target = $region48
        $region47: #{tpu_custom_call.1} parent=31 // pred_region
          %s375 = smul.u32 2, %s21
          %377 = vsyncadd %s368, 0
          %s378 = smul.addr %s375, 4
          %s379 = smul.addr %s378, 8
          %s380 = scalar_lea.hbm %s3, %s379
          %s381 = sshll.u32 %s371, 4
          %s382 = int_to_ptr.vmem [resolvable:$true] %s381
          %s383 = sshll.u32 %s380, 4
          %s384 = int_to_ptr.hbm [resolvable:$true] %s383
          %389 = dma.vmem_to_hbm [thread:$0]  %s382, 1024, %s384, %s368, 512, 512, 32
        $region48: #{tpu_custom_call.1} parent=31 // pred_fallthru
          _
      $region32: #{tpu_custom_call.1} parent=5 // pred_fallthru
        _
      %p390 = scmp.le.s32.totalorder 2, %s16
      // Predicated region
      $region49: #{tpu_custom_call.1} parent=5 // pred_check
        %p391 = pneg %p390
      $region50: #{tpu_custom_call.1} parent=5 // pred_check_branch
        %393 = sbr.rel (%p391) target = $region52
      $region51: #{tpu_custom_call.1} parent=5 // pred_region
        %s394 = ssub.s32 %s16, 2
        // Predicated region
        $region53: #{tpu_custom_call.1} parent=51 // pred_check
          %p395 = pneg %p113
        $region54: #{tpu_custom_call.1} parent=51 // pred_check_branch
          %397 = sbr.rel (%p395) target = $region56
        $region55: #{tpu_custom_call.1} parent=51 // pred_region
          %s398 = sand.u32 %s98, 1
          %s399 = scalar_lea.sflag [#allocation4], %s398
          %s400 = sand.u32 %s98, 1
          %s401 = smul.addr %s400, 64
          %s402 = scalar_lea.vmem [#allocation8], %s401
          %404 = dma.done %s399, 1024
        $region56: #{tpu_custom_call.1} parent=51 // pred_fallthru
          _
      $region52: #{tpu_custom_call.1} parent=5 // pred_fallthru
        _
    $region6: #{tpu_custom_call.1} parent=1 // loop_footer
      %s20 = sadd.s32 1, %s16
    $region7: #{tpu_custom_call.1} parent=1 // loop_footer_branch
      %15 = sbr.rel target = $region3
    $region8: #{tpu_custom_call.1} parent=1 // loop_exit
      _
    %405 = vsyncpa [#allocation3], 1
    %s406 = scalar_lea.sflag [#allocation3], 1
    %407 = vsyncpa %s406, 1
    %408 = vsyncpa [#allocation6], 1
    %409 = vsyncpa [#allocation4], 1
    %s410 = scalar_lea.sflag [#allocation4], 1
    %411 = vsyncpa %s410, 1

// kernel: tpu_custom_call.1
$region0: #{tpu_custom_call.1}
  #allocation0 [shape = 'u32[]', space=smem, size = 0x4, offset = 0x4, fixed_abs, tag = 'smem constant byte address 0x4 - core index']
  #allocation1 [shape = 'u32[72,128]{1,0:T(1,128)}', space=vmem, size = 0x9000, scoped, tag = 'internal scratch']
  %s0 = inlined_call_operand.hbm [shape: f32[32,48], index: 0, kind: input, shape index: {}]
  %s1 = inlined_call_operand.hbm [shape: f32[48,512], index: 1, kind: input, shape index: {}]
  %s2 = inlined_call_operand.hbm [shape: f32[1,512], index: 2, kind: input, shape index: {}]
  %s3 = inlined_call_operand.hbm [shape: f32[32,512], index: 3, kind: output, shape index: {}]
  %s4 = sld [smem:[#allocation0]]
  $region57: #{tpu_custom_call.1} parent=0
    _
  %s6 = ssub.s32 1, %s4
  %s7 = scalar_select 0, %s6, %s4
  $region1: #{tpu_custom_call.1} parent=0
    #allocation2 [shape = 'u8[16384]{0}', space=vmem, size = 0x4000, scoped, tag = 'input window, operand 0']
    #allocation3 [shape = 's32[2]{0}', space=sflag, size = 0x8, scoped, tag = 'scoped memory for tpu_custom_call.1']
    #allocation4 [shape = 's32[2]{0}', space=sflag, size = 0x8, scoped, tag = 'scoped memory for tpu_custom_call.1']
    #allocation5 [shape = 'u8[98304]{0}', space=vmem, size = 0x18000, scoped, tag = 'input window, operand 1, single buffered']
    #allocation6 [shape = 's32[1]{0}', space=sflag, size = 0x4, scoped, tag = 'scoped memory for tpu_custom_call.1']
    #allocation7 [shape = 'u8[2048]{0}', space=vmem, size = 0x800, scoped, tag = 'input window, operand 2, single buffered']
    #allocation8 [shape = 'u8[65536]{0}', space=vmem, size = 0x10000, scoped, tag = 'output window, operand 0']
    %8 = vsyncpa [#allocation3], 0
    %s9 = scalar_lea.sflag [#allocation3], 1
    %10 = vsyncpa %s9, 0
    %11 = vsyncpa [#allocation6], 0
    %12 = vsyncpa [#allocation4], 0
    %s13 = scalar_lea.sflag [#allocation4], 1
    %14 = vsyncpa %s13, 0
    loop: start=0, step=1, limit=4
    $region2: #{tpu_custom_call.1} parent=1 // loop_pre_header
      _
    $region3: #{tpu_custom_call.1} parent=1 // loop_header
      %s16 = sphi 0, %s20
      %p17 = scmp.ge.s32.totalorder %s16, 4
      %s26 = sphi 0, %s28
      %s29 = sphi 0, %s26
      %s30 = sphi 0, %s29
      %s46 = sphi 0, %s30
      %s50 = sphi 0, %s50
      %s52 = sphi 0, %s50
      %s53 = sphi 0, %s52
      %s67 = sphi 0, %s53
      %s71 = sphi 0, %s71
      %s73 = sphi 0, %s71
      %s74 = sphi 0, %s73
      %s88 = sphi 0, %s74
      %s94 = sphi 0, %s96
      %s97 = sphi 0, %s94
      %s98 = sphi 0, %s97
      %s114 = sphi 0, %s98
    $region4: #{tpu_custom_call.1} parent=1 // loop_header_branch
      %19 = sbr.rel (%p17) target = $region8
    $region5: #{tpu_custom_call.1} parent=1 // loop_body
      %s21 = ssub.s32 %s16, 1
      %s22 = ssub.s32 %s16, 2
      %s23 = sadd.s32 %s16, 1
      %s24 = ssub.s32 %s16, %s23
      %p25 = scmp.eq.s32.totalorder %s24, 0
      %s27 = sadd.s32 %s26, 1
      %s28 = scalar_select %p25, %s26, %s27
      %p31 = pneg %p25
      %p32 = scmp.eq.s32.totalorder %s16, 1
      %p33 = por %p31, %p32
      %p34 = scmp.ne.s32.totalorder %s26, %s29
      %p35 = scmp.eq.s32.totalorder %s16, 0
      %p36 = por %p34, %p35
      %p37 = scmp.ne.s32.totalorder %s26, %s29
      %p38 = scmp.eq.s32.totalorder %s21, 1
      %p39 = por %p37, %p38
      %p40 = scmp.ne.s32.totalorder %s29, %s30
      %p41 = scmp.eq.s32.totalorder %s21, 0
      %p42 = por %p40, %p41
      %p43 = scmp.ne.s32.totalorder %s29, %s30
      %p44 = scmp.eq.s32.totalorder %s22, 1
      %p45 = por %p43, %p44
      %p47 = scmp.ne.s32.totalorder %s30, %s46
      %p48 = scmp.eq.s32.totalorder %s22, 0
      %p49 = por %p47, %p48
      %s51 = sadd.s32 %s50, 1
      %p54 = scmp.eq.s32.totalorder %s16, 1
      %p55 = scmp.ne.s32.totalorder %s50, %s52
      %p56 = scmp.eq.s32.totalorder %s16, 0
      %p57 = por %p55, %p56
      %p58 = scmp.ne.s32.totalorder %s50, %s52
      %p59 = scmp.eq.s32.totalorder %s21, 1
      %p60 = por %p58, %p59
      %p61 = scmp.ne.s32.totalorder %s52, %s53
      %p62 = scmp.eq.s32.totalorder %s21, 0
      %p63 = por %p61, %p62
      %p64 = scmp.ne.s32.totalorder %s52, %s53
      %p65 = scmp.eq.s32.totalorder %s22, 1
      %p66 = por %p64, %p65
      %p68 = scmp.ne.s32.totalorder %s53, %s67
      %p69 = scmp.eq.s32.totalorder %s22, 0
      %p70 = por %p68, %p69
      %s72 = sadd.s32 %s71, 1
      %p75 = scmp.eq.s32.totalorder %s16, 1
      %p76 = scmp.ne.s32.totalorder %s71, %s73
      %p77 = scmp.eq.s32.totalorder %s16, 0
      %p78 = por %p76, %p77
      %p79 = scmp.ne.s32.totalorder %s71, %s73
      %p80 = scmp.eq.s32.totalorder %s21, 1
      %p81 = por %p79, %p80
      %p82 = scmp.ne.s32.totalorder %s73, %s74
      %p83 = scmp.eq.s32.totalorder %s21, 0
      %p84 = por %p82, %p83
      %p85 = scmp.ne.s32.totalorder %s73, %s74
      %p86 = scmp.eq.s32.totalorder %s22, 1
      %p87 = por %p85, %p86
      %p89 = scmp.ne.s32.totalorder %s74, %s88
      %p90 = scmp.eq.s32.totalorder %s22, 0
      %p91 = por %p89, %p90
      %s92 = ssub.s32 %s16, %s23
      %p93 = scmp.eq.s32.totalorder %s92, 0
      %s95 = sadd.s32 %s94, 1
      %s96 = scalar_select %p93, %s94, %s95
      %p99 = pneg %p93
      %p100 = scmp.eq.s32.totalorder %s16, 1
      %p101 = por %p99, %p100
      %p102 = scmp.ne.s32.totalorder %s94, %s97
      %p103 = scmp.eq.s32.totalorder %s16, 0
      %p104 = por %p102, %p103
      %p105 = scmp.ne.s32.totalorder %s94, %s97
      %p106 = scmp.eq.s32.totalorder %s21, 1
      %p107 = por %p105, %p106
      %p108 = scmp.ne.s32.totalorder %s97, %s98
      %p109 = scmp.eq.s32.totalorder %s21, 0
      %p110 = por %p108, %p109
      %p111 = scmp.ne.s32.totalorder %s97, %s98
      %p112 = scmp.eq.s32.totalorder %s22, 1
      %p113 = por %p111, %p112
      %p115 = scmp.ne.s32.totalorder %s98, %s114
      %p116 = scmp.eq.s32.totalorder %s22, 0
      %p117 = por %p115, %p116
      %p118 = scmp.le.s32.totalorder 1, %s16
      %p119 = scmp.lt.s32.totalorder %s16, 3
      %p120 = pnand %p118, %p119
      %p121 = pneg %p120
      // Predicated region
      $region9: #{tpu_custom_call.1} parent=5 // pred_check
        _
      $region10: #{tpu_custom_call.1} parent=5 // pred_check_branch
        %123 = sbr.rel (%p120) target = $region12
      $region11: #{tpu_custom_call.1} parent=5 // pred_region
        %s124 = ssub.s32 %s16, 1
        // Predicated region
        $region13: #{tpu_custom_call.1} parent=11 // pred_check
          %p125 = pneg %p63
        $region14: #{tpu_custom_call.1} parent=11 // pred_check_branch
          %127 = sbr.rel (%p125) target = $region16
        $region15: #{tpu_custom_call.1} parent=11 // pred_region
          %129 = vsyncadd [#allocation6], 0
          %s130 = sshll.u32 %s1, 4
          %s131 = int_to_ptr.hbm [resolvable:$true] %s130
          %s132 = sshll.u32 [#allocation5], 4
          %s133 = int_to_ptr.vmem [resolvable:$true] %s132
          %138 = dma.hbm_to_vmem [thread:$0]  %s131, 3072, %s133, [#allocation6], 512, 512, 32
        $region16: #{tpu_custom_call.1} parent=11 // pred_fallthru
          _
        // Predicated region
        $region17: #{tpu_custom_call.1} parent=11 // pred_check
          %p139 = pneg %p84
        $region18: #{tpu_custom_call.1} parent=11 // pred_check_branch
          %141 = sbr.rel (%p139) target = $region20
        $region19: #{tpu_custom_call.1} parent=11 // pred_region
          %143 = vsyncadd [#allocation6], 0
          %s145 = sshll.u32 %s2, 4
          %s146 = int_to_ptr.hbm [resolvable:$true] %s145
          %s147 = sshll.u32 [#allocation7], 4
          %s148 = int_to_ptr.vmem [resolvable:$true] %s147
          %150 = dma.hbm_to_vmem [thread:$0]  %s146, 64, %s148, [#allocation6]
        $region20: #{tpu_custom_call.1} parent=11 // pred_fallthru
          _
      $region12: #{tpu_custom_call.1} parent=5 // pred_fallthru
        _
      %p151 = scmp.lt.s32.totalorder %s16, 2
      // Predicated region
      $region21: #{tpu_custom_call.1} parent=5 // pred_check
        %p152 = pneg %p151
      $region22: #{tpu_custom_call.1} parent=5 // pred_check_branch
        %154 = sbr.rel (%p152) target = $region24
      $region23: #{tpu_custom_call.1} parent=5 // pred_region
        // Predicated region
        $region25: #{tpu_custom_call.1} parent=23 // pred_check
          %p155 = pneg %p36
        $region26: #{tpu_custom_call.1} parent=23 // pred_check_branch
          %157 = sbr.rel (%p155) target = $region28
        $region27: #{tpu_custom_call.1} parent=23 // pred_region
          %s158 = sand.u32 %s26, 1
          %s159 = scalar_lea.sflag [#allocation3], %s158
          %s160 = sand.u32 %s26, 1
          %s161 = smul.addr %s160, 16
          %s162 = scalar_lea.vmem [#allocation2], %s161
          %s163 = smul.u32 2, %s16
          %165 = vsyncadd %s159, 0
          %s166 = smul.addr %s163, 8
          %s167 = scalar_lea.hbm %s0, %s166
          %s168 = sshll.u32 %s167, 4
          %s169 = int_to_ptr.hbm [resolvable:$true] %s168
          %s170 = sshll.u32 %s162, 4
          %s171 = int_to_ptr.vmem [resolvable:$true] %s170
          %176 = dma.hbm_to_vmem [thread:$0]  %s169, 256, %s171, %s159, 128, 128, 8
        $region28: #{tpu_custom_call.1} parent=23 // pred_fallthru
          _
      $region24: #{tpu_custom_call.1} parent=5 // pred_fallthru
        _
      %p177 = scmp.le.s32.totalorder 1, %s16
      %p178 = scmp.lt.s32.totalorder %s16, 3
      %p179 = pnand %p177, %p178
      %p180 = pneg %p179
      // Predicated region
      $region29: #{tpu_custom_call.1} parent=5 // pred_check
        _
      $region30: #{tpu_custom_call.1} parent=5 // pred_check_branch
        %182 = sbr.rel (%p179) target = $region32
      $region31: #{tpu_custom_call.1} parent=5 // pred_region
        %s183 = ssub.s32 %s16, 1
        %s184 = sand.u32 %s29, 1
        %s185 = scalar_lea.sflag [#allocation3], %s184
        %s186 = sand.u32 %s29, 1
        %s187 = smul.addr %s186, 16
        %s188 = scalar_lea.vmem [#allocation2], %s187
        // Predicated region
        $region33: #{tpu_custom_call.1} parent=31 // pred_check
          %p189 = pneg %p42
        $region34: #{tpu_custom_call.1} parent=31 // pred_check_branch
          %191 = sbr.rel (%p189) target = $region36
        $region35: #{tpu_custom_call.1} parent=31 // pred_region
          %193 = dma.done %s185, 256
        $region36: #{tpu_custom_call.1} parent=31 // pred_fallthru
          _
        // Predicated region
        $region37: #{tpu_custom_call.1} parent=31 // pred_check
          %p194 = pneg %p63
        $region38: #{tpu_custom_call.1} parent=31 // pred_check_branch
          %196 = sbr.rel (%p194) target = $region40
        $region39: #{tpu_custom_call.1} parent=31 // pred_region
          %198 = dma.done [#allocation6], 3072
        $region40: #{tpu_custom_call.1} parent=31 // pred_fallthru
          _
        // Predicated region
        $region41: #{tpu_custom_call.1} parent=31 // pred_check
          %p199 = pneg %p84
        $region42: #{tpu_custom_call.1} parent=31 // pred_check_branch
          %201 = sbr.rel (%p199) target = $region44
        $region43: #{tpu_custom_call.1} parent=31 // pred_region
          %203 = dma.done [#allocation6], 64
        $region44: #{tpu_custom_call.1} parent=31 // pred_fallthru
          _
        %s204 = sand.u32 %s29, 1
        %s205 = scalar_lea.sflag [#allocation3], %s204
        %s206 = sand.u32 %s29, 1
        %s207 = smul.addr %s206, 16
        %s208 = scalar_lea.vmem [#allocation2], %s207
        %p209 = pneg %p42
        %p210 = pneg %p39
        %p211 = pneg %p63
        %p212 = pneg %p60
        %p213 = pneg %p84
        %p214 = pneg %p81
        %p215 = pneg %p110
        %p216 = pneg %p107
        %s217 = sand.u32 %s97, 1
        %s218 = scalar_lea.sflag [#allocation4], %s217
        %s219 = sand.u32 %s97, 1
        %s220 = smul.addr %s219, 64
        %s221 = scalar_lea.vmem [#allocation8], %s220
        %s222 = smul.u32 2, %s21
        %s223 = smul.u32 2, %s21
        %v224 = vld [vmem:[%s188] sm:$0xff]
        %v225 = vld [vmem:[%s188 + $0x8] sm:$0xff]
        %v226 = vld [vmem:[#allocation5] sm:$0xff]
        %v227 = vld [vmem:[#allocation5 + $0x8] sm:$0xff]
        %v228 = vld [vmem:[#allocation5 + $0x10] sm:$0xff]
        %v229 = vld [vmem:[#allocation5 + $0x18] sm:$0xff]
        %v230 = vld [vmem:[#allocation5 + $0x20] sm:$0xff]
        %v231 = vld [vmem:[#allocation5 + $0x28] sm:$0xff]
        %v232 = vld [vmem:[#allocation5 + $0x30] sm:$0xff]
        %v233 = vld [vmem:[#allocation5 + $0x38] sm:$0xff]
        %v234 = vld [vmem:[#allocation5 + $0x40] sm:$0xff]
        %v235 = vld [vmem:[#allocation5 + $0x48] sm:$0xff]
        %v236 = vld [vmem:[#allocation5 + $0x50] sm:$0xff]
        %v237 = vld [vmem:[#allocation5 + $0x58] sm:$0xff]
        %v238 = vld [vmem:[#allocation5 + $0x60] sm:$0xff]
        %v239 = vld [vmem:[#allocation5 + $0x68] sm:$0xff]
        %v240 = vld [vmem:[#allocation5 + $0x70] sm:$0xff]
        %v241 = vld [vmem:[#allocation5 + $0x78] sm:$0xff]
        %v242 = vld [vmem:[#allocation5 + $0x80] sm:$0xff]
        %v243 = vld [vmem:[#allocation5 + $0x88] sm:$0xff]
        %v244 = vld [vmem:[#allocation5 + $0x90] sm:$0xff]
        %v245 = vld [vmem:[#allocation5 + $0x98] sm:$0xff]
        %v246 = vld [vmem:[#allocation5 + $0xa0] sm:$0xff]
        %v247 = vld [vmem:[#allocation5 + $0xa8] sm:$0xff]
        %v248 = vld [vmem:[#allocation5 + $0xb0] sm:$0xff]
        %v249 = vld [vmem:[#allocation5 + $0xb8] sm:$0xff]
        %v250 = vld [vmem:[#allocation7] sm:$0xf]
        %v252 = vperm.slane %v250, 0
        %v253 = vperm.slane %v250, 1
        %v254 = vperm.slane %v250, 2
        %v255 = vperm.slane %v250, 3
        %vm260 = vcmask 392192
        %v262 = vsel %vm260, %v224, 0
        %v265 = vsel %vm260, %v225, 0
        %267 = vmatpush.msra.mxu0 0.0
        %268 = vmatpush.msra.mxu0 0.0
        %269 = vmatpush.msra.mxu0 0.0
        %270 = vmatpush.msra.mxu0 0.0
        %271 = vmatpush.msra.mxu0 0.0
        %272 = vmatpush.msra.mxu0 0.0
        %273 = vmatpush.msra.mxu0 0.0
        %274 = vmatpush.msra.mxu0 0.0
        %275 = vmatpush.msra.mxu0 0.0
        %276 = vmatpush.msra.mxu0 0.0
        %277 = vmatpush.msra.mxu0 %v246
        %278 = vmatpush.msra.mxu0 %v242
        %279 = vmatpush.msra.mxu0 %v238
        %280 = vmatpush.msra.mxu0 %v234
        %281 = vmatpush.msra.mxu0 %v230
        %282 = vmatpush.msra.mxu0 %v226
        %283 = vmatmul.f32.gmra.mxu0 %v262
        %v284 = vpop.f32.mrf.mxu0
        %v285 = vadd.f32 %v252, %v284
        %286 = vmatmul.f32.gmra.mxu0 %v265
        %v287 = vpop.f32.mrf.mxu0
        %v288 = vadd.f32 %v252, %v287
        %289 = vdwg.mxu0
        %290 = vmatpush.msra.mxu0 0.0
        %291 = vmatpush.msra.mxu0 0.0
        %292 = vmatpush.msra.mxu0 0.0
        %293 = vmatpush.msra.mxu0 0.0
        %294 = vmatpush.msra.mxu0 0.0
        %295 = vmatpush.msra.mxu0 0.0
        %296 = vmatpush.msra.mxu0 0.0
        %297 = vmatpush.msra.mxu0 0.0
        %298 = vmatpush.msra.mxu0 0.0
        %299 = vmatpush.msra.mxu0 0.0
        %300 = vmatpush.msra.mxu0 %v247
        %301 = vmatpush.msra.mxu0 %v243
        %302 = vmatpush.msra.mxu0 %v239
        %303 = vmatpush.msra.mxu0 %v235
        %304 = vmatpush.msra.mxu0 %v231
        %305 = vmatpush.msra.mxu0 %v227
        %306 = vmatmul.f32.gmra.mxu0 %v262
        %v307 = vpop.f32.mrf.mxu0
        %v308 = vadd.f32 %v253, %v307
        %309 = vmatmul.f32.gmra.mxu0 %v265
        %v310 = vpop.f32.mrf.mxu0
        %v311 = vadd.f32 %v253, %v310
        %312 = vdwg.mxu0
        %313 = vmatpush.msra.mxu0 0.0
        %314 = vmatpush.msra.mxu0 0.0
        %315 = vmatpush.msra.mxu0 0.0
        %316 = vmatpush.msra.mxu0 0.0
        %317 = vmatpush.msra.mxu0 0.0
        %318 = vmatpush.msra.mxu0 0.0
        %319 = vmatpush.msra.mxu0 0.0
        %320 = vmatpush.msra.mxu0 0.0
        %321 = vmatpush.msra.mxu0 0.0
        %322 = vmatpush.msra.mxu0 0.0
        %323 = vmatpush.msra.mxu0 %v248
        %324 = vmatpush.msra.mxu0 %v244
        %325 = vmatpush.msra.mxu0 %v240
        %326 = vmatpush.msra.mxu0 %v236
        %327 = vmatpush.msra.mxu0 %v232
        %328 = vmatpush.msra.mxu0 %v228
        %329 = vmatmul.f32.gmra.mxu0 %v262
        %v330 = vpop.f32.mrf.mxu0
        %v331 = vadd.f32 %v254, %v330
        %332 = vmatmul.f32.gmra.mxu0 %v265
        %v333 = vpop.f32.mrf.mxu0
        %v334 = vadd.f32 %v254, %v333
        %335 = vdwg.mxu0
        %336 = vmatpush.msra.mxu0 0.0
        %337 = vmatpush.msra.mxu0 0.0
        %338 = vmatpush.msra.mxu0 0.0
        %339 = vmatpush.msra.mxu0 0.0
        %340 = vmatpush.msra.mxu0 0.0
        %341 = vmatpush.msra.mxu0 0.0
        %342 = vmatpush.msra.mxu0 0.0
        %343 = vmatpush.msra.mxu0 0.0
        %344 = vmatpush.msra.mxu0 0.0
        %345 = vmatpush.msra.mxu0 0.0
        %346 = vmatpush.msra.mxu0 %v249
        %347 = vmatpush.msra.mxu0 %v245
        %348 = vmatpush.msra.mxu0 %v241
        %349 = vmatpush.msra.mxu0 %v237
        %350 = vmatpush.msra.mxu0 %v233
        %351 = vmatpush.msra.mxu0 %v229
        %352 = vmatmul.f32.gmra.mxu0 %v262
        %v353 = vpop.f32.mrf.mxu0
        %v354 = vadd.f32 %v255, %v353
        %355 = vmatmul.f32.gmra.mxu0 %v265
        %v356 = vpop.f32.mrf.mxu0
        %v357 = vadd.f32 %v255, %v356
        %358 = vdwg.mxu0
        %359 = vst [vmem:[%s221] sm:$0xff] %v285
        %360 = vst [vmem:[%s221 + $0x8] sm:$0xff] %v308
        %361 = vst [vmem:[%s221 + $0x10] sm:$0xff] %v331
        %362 = vst [vmem:[%s221 + $0x18] sm:$0xff] %v354
        %363 = vst [vmem:[%s221 + $0x20] sm:$0xff] %v288
        %364 = vst [vmem:[%s221 + $0x28] sm:$0xff] %v311
        %365 = vst [vmem:[%s221 + $0x30] sm:$0xff] %v334
        %366 = vst [vmem:[%s221 + $0x38] sm:$0xff] %v357
        %s367 = sand.u32 %s97, 1
        %s368 = scalar_lea.sflag [#allocation4], %s367
        %s369 = sand.u32 %s97, 1
        %s370 = smul.addr %s369, 64
        %s371 = scalar_lea.vmem [#allocation8], %s370
        // Predicated region
        $region45: #{tpu_custom_call.1} parent=31 // pred_check
          %p372 = pneg %p107
        $region46: #{tpu_custom_call.1} parent=31 // pred_check_branch
          %374 = sbr.rel (%p372) target = $region48
        $region47: #{tpu_custom_call.1} parent=31 // pred_region
          %s375 = smul.u32 2, %s21
          %377 = vsyncadd %s368, 0
          %s378 = smul.addr %s375, 4
          %s379 = smul.addr %s378, 8
          %s380 = scalar_lea.hbm %s3, %s379
          %s381 = sshll.u32 %s371, 4
          %s382 = int_to_ptr.vmem [resolvable:$true] %s381
          %s383 = sshll.u32 %s380, 4
          %s384 = int_to_ptr.hbm [resolvable:$true] %s383
          %389 = dma.vmem_to_hbm [thread:$0]  %s382, 1024, %s384, %s368, 512, 512, 32
        $region48: #{tpu_custom_call.1} parent=31 // pred_fallthru
          _
      $region32: #{tpu_custom_call.1} parent=5 // pred_fallthru
        _
      %p390 = scmp.le.s32.totalorder 2, %s16
      // Predicated region
      $region49: #{tpu_custom_call.1} parent=5 // pred_check
        %p391 = pneg %p390
      $region50: #{tpu_custom_call.1} parent=5 // pred_check_branch
        %393 = sbr.rel (%p391) target = $region52
      $region51: #{tpu_custom_call.1} parent=5 // pred_region
        %s394 = ssub.s32 %s16, 2
        // Predicated region
        $region53: #{tpu_custom_call.1} parent=51 // pred_check
          %p395 = pneg %p113
        $region54: #{tpu_custom_call.1} parent=51 // pred_check_branch
          %397 = sbr.rel (%p395) target = $region56
        $region55: #{tpu_custom_call.1} parent=51 // pred_region
          %s398 = sand.u32 %s98, 1
          %s399 = scalar_lea.sflag [#allocation4], %s398
          %s400 = sand.u32 %s98, 1
          %s401 = smul.addr %s400, 64
          %s402 = scalar_lea.vmem [#allocation8], %s401
          %404 = dma.done %s399, 1024
        $region56: #{tpu_custom_call.1} parent=51 // pred_fallthru
          _
      $region52: #{tpu_custom_call.1} parent=5 // pred_fallthru
        _
    $region6: #{tpu_custom_call.1} parent=1 // loop_footer
      %s20 = sadd.s32 1, %s16
    $region7: #{tpu_custom_call.1} parent=1 // loop_footer_branch
      %15 = sbr.rel target = $region3
    $region8: #{tpu_custom_call.1} parent=1 // loop_exit
      _
    %405 = vsyncpa [#allocation3], 1
    %s406 = scalar_lea.sflag [#allocation3], 1
    %407 = vsyncpa %s406, 1
    %408 = vsyncpa [#allocation6], 1
    %409 = vsyncpa [#allocation4], 1
    %s410 = scalar_lea.sflag [#allocation4], 1
    %411 = vsyncpa %s410, 1

</llo_original>
